<compile_context>
chip_gen: v7x
topology: tpu7x:2x2x1
jax: 0.10.0
libtpu: 0.0.40
codegen_flags: <defaults>
</compile_context>

<pallas_src>
import functools

import jax
import jax.numpy as jnp
from jax import lax
from jax.experimental import pallas as pl
from jax.experimental.pallas import tpu as pltpu


def _lsce_kernel(x_ref, t_ref, out_ref, *, eps, num_classes, n_rows, block_n):
    """Per-row smoothed CE for one row tile.

    x_ref:   (TN, C)  logits tile (any float dtype; upcast in-register)
    t_ref:   (TN, 1)  int32 targets tile
    out_ref: (TN, 1)  f32 per-row losses (0 for padded rows)
    """
    i = pl.program_id(0)

    x = x_ref[...].astype(jnp.float32)                     # (TN, C)

    # Numerically-stable row reductions. Never materialize logp:
    #   per_row = lse - (eps/C) * sum_c(shifted) - (1-eps) * shifted[target]
    m = jnp.max(x, axis=-1, keepdims=True)                 # (TN, 1)
    shifted = x - m
    lse = jnp.log(jnp.sum(jnp.exp(shifted), axis=-1, keepdims=True))  # (TN, 1)

    row_sum = jnp.sum(shifted, axis=-1, keepdims=True)     # (TN, 1)
    col = lax.broadcasted_iota(jnp.int32, shifted.shape, 1)
    tgt_val = jnp.sum(jnp.where(col == t_ref[...], shifted, 0.0),
                      axis=-1, keepdims=True)              # (TN, 1)

    per_row = lse - (eps / num_classes) * row_sum - (1.0 - eps) * tgt_val

    # Mask rows of the (possibly partial) last tile so padded/garbage rows
    # contribute exactly 0 to the output.
    row_idx = i * block_n + lax.broadcasted_iota(jnp.int32, per_row.shape, 0)
    out_ref[...] = jnp.where(row_idx < n_rows, per_row, 0.0)


def _vmem_limit_bytes():
    # Size against physical VMEM: 128 MiB on v5e/v6e, 64 MiB per core on v7x.
    try:
        cap = int(pltpu.get_tpu_info().vmem_capacity_bytes)
    except Exception:
        cap = 64 * 1024 * 1024  # conservative fallback (v7x per-TC)
    # Leave ~25% headroom for compiler-internal scratch; cap below physical.
    return min((cap * 3) // 4, 100 * 1024 * 1024)


def _pick_block_n(n, c, vmem_limit):
    # Budget the logits tile at ~1/8 of the VMEM limit per buffer: Pallas
    # double-buffers the input and the kernel holds a couple of f32-sized
    # temporaries of the same tile shape. Budget with 4 B/elem (f32 temps).
    per_buf = max(vmem_limit // 8, 1 << 20)
    rows = per_buf // max(1, c * 4)
    rows = max(8, min(int(rows), 2048))
    rows = (rows // 8) * 8                   # sublane-aligned
    n_pad = ((n + 7) // 8) * 8
    return min(rows, n_pad)


def label_smoothing_cross_entropy(output, target, eps=0.1, reduction="mean"):
    """Pallas TPU implementation of LabelSmoothingCrossEntropy.forward.

    output: (N, C) float logits
    target: (N,)   int class indices
    reduction: 'mean' | 'sum' | 'none'
    """
    N, C = output.shape
    vmem_limit = _vmem_limit_bytes()
    block_n = _pick_block_n(N, C, vmem_limit)
    num_blocks = (N + block_n - 1) // block_n
    n_pad = num_blocks * block_n
    # TODO(synk): for vocab-scale C where even 8 rows x C exceeds the VMEM
    # budget, add a second grid axis over C with an online (flash-style)
    # max/logsumexp accumulator.

    t2d = target.astype(jnp.int32).reshape(N, 1)

    kernel = functools.partial(_lsce_kernel, eps=float(eps),
                               num_classes=float(C), n_rows=N, block_n=block_n)

    per_row = pl.pallas_call(
        kernel,
        out_shape=jax.ShapeDtypeStruct((n_pad, 1), jnp.float32),
        grid_spec=pltpu.PrefetchScalarGridSpec(
            num_scalar_prefetch=0,
            grid=(num_blocks,),
            in_specs=[
                pl.BlockSpec((block_n, C), lambda i: (i, 0)),
                pl.BlockSpec((block_n, 1), lambda i: (i, 0)),
            ],
            out_specs=pl.BlockSpec((block_n, 1), lambda i: (i, 0)),
        ),
        compiler_params=pltpu.CompilerParams(
            dimension_semantics=("parallel",),
            vmem_limit_bytes=vmem_limit,
        ),
    )(output, t2d)

    if reduction == "none":
        return per_row[:N, 0]
    total = jnp.sum(per_row)
    if reduction == "mean":
        return total / N
    return total  # 'sum'


def _reference(output, target, eps=0.1, reduction="mean"):
    c = output.shape[-1]
    log_preds = jax.nn.log_softmax(output.astype(jnp.float32), axis=-1)
    nll_rows = -jnp.take_along_axis(
        log_preds, target[:, None].astype(jnp.int32), axis=-1)[:, 0]
    if reduction == "sum":
        loss = -jnp.sum(log_preds)
        nll = jnp.sum(nll_rows)
    elif reduction == "mean":
        loss = jnp.mean(-jnp.sum(log_preds, axis=-1))
        nll = jnp.mean(nll_rows)
    else:  # 'none'
        loss = -jnp.sum(log_preds, axis=-1)
        nll = nll_rows
    return loss * eps / c + (1.0 - eps) * nll


if __name__ == "__main__":
    key = jax.random.PRNGKey(0)
    k1, k2, k3, k4 = jax.random.split(key, 4)

    # Small aligned case: batch=16, classes=32.
    N, C = 16, 32
    logits = jax.random.normal(k1, (N, C), dtype=jnp.float32)
    target = jax.random.randint(k2, (N,), 0, C, dtype=jnp.int32)
    for red in ("mean", "sum", "none"):
        got = jax.block_until_ready(
            label_smoothing_cross_entropy(logits, target, eps=0.1,
                                          reduction=red))
        ref = _reference(logits, target, eps=0.1, reduction=red)
        assert jnp.allclose(got, ref, rtol=1e-5, atol=1e-5), (red, got, ref)

    # Ragged row count exercises the partial last tile + row-validity mask.
    N2, C2 = 13, 40
    logits2 = jax.random.normal(k3, (N2, C2), dtype=jnp.float32)
    target2 = jax.random.randint(k4, (N2,), 0, C2, dtype=jnp.int32)
    got2 = jax.block_until_ready(
        label_smoothing_cross_entropy(logits2, target2, eps=0.1,
                                      reduction="mean"))
    ref2 = _reference(logits2, target2, eps=0.1, reduction="mean")
    assert jnp.allclose(got2, ref2, rtol=1e-5, atol=1e-5), (got2, ref2)

    print("KERNEL_OK")
</pallas_src>

<mosaic_0001>
module attributes {stable_mosaic.version = 11 : i64} {
  func.func @_lsce_kernel(%arg0: i32, %arg1: memref<16x32xf32, #tpu.memory_space<vmem>>, %arg2: memref<16x1xi32, #tpu.memory_space<vmem>>, %arg3: memref<16x1xf32, #tpu.memory_space<vmem>>) attributes {dimension_semantics = [#tpu.dimension_semantics<parallel>], iteration_bounds = array<i64: 1>, scalar_prefetch = 0 : i64, scratch_operands = 0 : i64, tpu.core_type = #tpu.core_type<tc>, window_params = [{transform_indices = @transform_0, window_bounds = array<i64: 16, 32>}, {transform_indices = @transform_1, window_bounds = array<i64: 16, 1>}, {transform_indices = @transform_2, window_bounds = array<i64: 16, 1>}]} {
    %c0 = arith.constant 0 : index
    %c0_0 = arith.constant 0 : index
    %0 = vector.load %arg1[%c0, %c0_0] : memref<16x32xf32, #tpu.memory_space<vmem>>, vector<16x32xf32>
    %cst = arith.constant dense<0xFF800000> : vector<16xf32>
    %1 = vector.multi_reduction <maximumf>, %0, %cst [1] : vector<16x32xf32> to vector<16xf32>
    %2 = vector.shape_cast %1 : vector<16xf32> to vector<16x1xf32>
    %3 = vector.broadcast %2 : vector<16x1xf32> to vector<16x32xf32>
    %4 = arith.subf %0, %3 : vector<16x32xf32>
    %5 = math.exp %4 : vector<16x32xf32>
    %cst_1 = arith.constant dense<0.000000e+00> : vector<16xf32>
    %6 = vector.multi_reduction <add>, %5, %cst_1 [1] : vector<16x32xf32> to vector<16xf32>
    %7 = vector.shape_cast %6 : vector<16xf32> to vector<16x1xf32>
    %8 = math.log %7 : vector<16x1xf32>
    %cst_2 = arith.constant dense<0.000000e+00> : vector<16xf32>
    %9 = vector.multi_reduction <add>, %4, %cst_2 [1] : vector<16x32xf32> to vector<16xf32>
    %10 = vector.shape_cast %9 : vector<16xf32> to vector<16x1xf32>
    %11 = tpu.iota {dimensions = array<i32: 1>} : vector<16x32xi32>
    %c0_3 = arith.constant 0 : index
    %c0_4 = arith.constant 0 : index
    %12 = vector.load %arg2[%c0_3, %c0_4] : memref<16x1xi32, #tpu.memory_space<vmem>>, vector<16x1xi32>
    %13 = vector.broadcast %12 : vector<16x1xi32> to vector<16x32xi32>
    %14 = arith.cmpi eq, %11, %13 : vector<16x32xi32>
    %cst_5 = arith.constant 0.000000e+00 : f32
    %15 = vector.broadcast %cst_5 : f32 to vector<16x32xf32>
    %16 = arith.select %14, %4, %15 : vector<16x32xi1>, vector<16x32xf32>
    %cst_6 = arith.constant dense<0.000000e+00> : vector<16xf32>
    %17 = vector.multi_reduction <add>, %16, %cst_6 [1] : vector<16x32xf32> to vector<16xf32>
    %18 = vector.shape_cast %17 : vector<16xf32> to vector<16x1xf32>
    %cst_7 = arith.constant 3.125000e-03 : f32
    %19 = vector.broadcast %cst_7 : f32 to vector<16x1xf32>
    %20 = arith.mulf %19, %10 : vector<16x1xf32>
    %21 = arith.subf %8, %20 : vector<16x1xf32>
    %cst_8 = arith.constant 0.899999976 : f32
    %22 = vector.broadcast %cst_8 : f32 to vector<16x1xf32>
    %23 = arith.mulf %22, %18 : vector<16x1xf32>
    %24 = arith.subf %21, %23 : vector<16x1xf32>
    %c16_i32 = arith.constant 16 : i32
    %25 = arith.muli %arg0, %c16_i32 : i32
    %26 = tpu.iota {dimensions = array<i32: 0>} : vector<16x1xi32>
    %27 = vector.broadcast %25 : i32 to vector<16x1xi32>
    %28 = arith.addi %27, %26 : vector<16x1xi32>
    %c16_i32_9 = arith.constant 16 : i32
    %29 = vector.broadcast %c16_i32_9 : i32 to vector<16x1xi32>
    %30 = arith.cmpi slt, %28, %29 : vector<16x1xi32>
    %cst_10 = arith.constant 0.000000e+00 : f32
    %31 = vector.broadcast %cst_10 : f32 to vector<16x1xf32>
    %32 = arith.select %30, %24, %31 : vector<16x1xi1>, vector<16x1xf32>
    %c0_11 = arith.constant 0 : index
    %c0_12 = arith.constant 0 : index
    %33 = vector.load %arg3[%c0_11, %c0_12] : memref<16x1xf32, #tpu.memory_space<vmem>>, vector<16x1xf32>
    tpu.vector_store %arg3[%c0_11, %c0_12], %32 {strides = array<i32>} : memref<16x1xf32, #tpu.memory_space<vmem>>, vector<16x1xf32>,
    return
  }
  func.func @transform_0(%arg0: i32) -> (i32, i32) {
    %c0_i32 = arith.constant 0 : i32
    %c0_i32_0 = arith.constant 0 : i32
    return %arg0, %c0_i32 : i32, i32
  }
  func.func @transform_1(%arg0: i32) -> (i32, i32) {
    %c0_i32 = arith.constant 0 : i32
    %c0_i32_0 = arith.constant 0 : i32
    return %arg0, %c0_i32 : i32, i32
  }
  func.func @transform_2(%arg0: i32) -> (i32, i32) {
    %c0_i32 = arith.constant 0 : i32
    %c0_i32_0 = arith.constant 0 : i32
    return %arg0, %c0_i32 : i32, i32
  }
}

</mosaic_0001>

<llo_original>
// kernel: tpu_custom_call.1
$region0: #{tpu_custom_call.1}
  #allocation0 [shape = 'u32[]', space=smem, size = 0x4, offset = 0x4, fixed_abs, tag = 'smem constant byte address 0x4 - core index']
  #allocation1 [shape = 'u32[144,128]{1,0:T(1,128)}', space=vmem, size = 0x12000, scoped, tag = 'internal scratch']
  %s0 = inlined_call_operand.vmem [shape: f32[16,32], index: 0, kind: input, shape index: {}]
  %s1 = inlined_call_operand.vmem [shape: s32[16,1], index: 1, kind: input, shape index: {}]
  %s2 = inlined_call_operand.vmem [shape: f32[16,1], index: 2, kind: output, shape index: {}]
  %s3 = sld [smem:[#allocation0]]
  $region18: #{tpu_custom_call.1} parent=0
    _
  %s5 = ssub.s32 1, %s3
  %s6 = scalar_select 0, %s5, %s3
  // Predicated region
  $region2: #{tpu_custom_call.1} parent=0 // pred_check
    _
  $region3: #{tpu_custom_call.1} parent=0 // pred_check_branch
    %8 = sbr.rel (0) target = $region5
  $region4: #{tpu_custom_call.1} parent=0 // pred_region
    _
  $region5: #{tpu_custom_call.1} parent=0 // pred_fallthru
    _
  // Predicated region
  $region6: #{tpu_custom_call.1} parent=0 // pred_check
    _
  $region7: #{tpu_custom_call.1} parent=0 // pred_check_branch
    %10 = sbr.rel (0) target = $region9
  $region8: #{tpu_custom_call.1} parent=0 // pred_region
    _
  $region9: #{tpu_custom_call.1} parent=0 // pred_fallthru
    _
  %v11 = vld [vmem:[%s0] sm:$0xff]
  %v12 = vld [vmem:[%s0 + $0x8] sm:$0xff]
  %vm13 = vcmask 261120
  %v14 = vsel %vm13, %v11, -inf
  %15 = vmax.xlane.f32.xlu0 %v14
  %v16 = vpop.xlane.xlu0 %15
  %v17 = vsel %vm13, %v12, -inf
  %18 = vmax.xlane.f32.xlu0 %v17
  %v19 = vpop.xlane.xlu0 %18
  %v20 = vsub.f32 %v11, %v16
  %v21 = vsub.f32 %v12, %v19
  %v22 = vmul.f32 %v20, 1.442695
  %v23 = vpow.pop %v22
  %v24 = vmul.f32 %v21, 1.442695
  %v25 = vpow.pop %v24
  %v26 = vsel %vm13, %v23, 0.0
  %27 = vadd.xlane.f32.xlu0 %v26
  %v28 = vpop.xlane.xlu0 %27
  %v29 = vsel %vm13, %v25, 0.0
  %30 = vadd.xlane.f32.xlu0 %v29
  %v31 = vpop.xlane.xlu0 %30
  %v32 = vlog2.pop %v28
  %v33 = vmul.f32 %v32, 0.6931472
  %v34 = vlog2.pop %v31
  %v35 = vmul.f32 %v34, 0.6931472
  %v36 = vsel %vm13, %v20, 0.0
  %37 = vadd.xlane.f32.xlu0 %v36
  %v38 = vpop.xlane.xlu0 %37
  %v39 = vsel %vm13, %v21, 0.0
  %40 = vadd.xlane.f32.xlu0 %v39
  %v41 = vpop.xlane.xlu0 %40
  %v42 = vlaneseq
  %v43 = vand.u32 %v42, 127
  %v44 = vld [vmem:[%s1] sm:$0xff]
  %v45 = vld [vmem:[%s1 + $0x8] sm:$0xff]
  %46 = vset.pattern.permute.xlu0 0
  %47 = vperm.xlu0 %46, %v44
  %v48 = vpop.permute.xlu0 %47
  %49 = vset.pattern.permute.xlu0 0
  %50 = vperm.xlu0 %49, %v45
  %v51 = vpop.permute.xlu0 %50
  %vm52 = vcmp.eq.s32.totalorder %v43, %v48
  %vm53 = vcmp.eq.s32.totalorder %v43, %v51
  %v54 = vsel %vm52, %v20, 0.0
  %v55 = vsel %vm53, %v21, 0.0
  %v56 = vsel %vm13, %v54, 0.0
  %57 = vadd.xlane.f32.xlu0 %v56
  %v58 = vpop.xlane.xlu0 %57
  %v59 = vsel %vm13, %v55, 0.0
  %60 = vadd.xlane.f32.xlu0 %v59
  %v61 = vpop.xlane.xlu0 %60
  %v62 = vmul.f32 %v38, 0.003125
  %v63 = vmul.f32 %v41, 0.003125
  %v64 = vsub.f32 %v33, %v62
  %v65 = vsub.f32 %v35, %v63
  %v66 = vmul.f32 %v58, 0.9
  %v67 = vmul.f32 %v61, 0.9
  %v68 = vsub.f32 %v64, %v66
  %v69 = vsub.f32 %v65, %v67
  %s70 = smul.u32 0, 16
  %v71 = vlaneseq
  %v72 = vshrl.u32 %v71, 7
  %v73 = vadd.s32 %v72, 8
  %v74 = vstv %s70
  %v75 = vadd.s32 %v74, %v72
  %v76 = vadd.s32 %v74, %v73
  %vm77 = vcmp.lt.s32.totalorder %v75, 16
  %vm78 = vcmp.lt.s32.totalorder %v76, 16
  %v79 = vsel %vm77, %v68, 0.0
  %v80 = vsel %vm78, %v69, 0.0
  %vm81 = vcmask 7168
  %82 = vst.msk [vmem:[%s2] sm:$0xff] %vm81, %v79
  %83 = vst.msk [vmem:[%s2 + $0x8] sm:$0xff] %vm81, %v80
  // Predicated region
  $region10: #{tpu_custom_call.1} parent=0 // pred_check
    _
  $region11: #{tpu_custom_call.1} parent=0 // pred_check_branch
    %85 = sbr.rel (0) target = $region13
  $region12: #{tpu_custom_call.1} parent=0 // pred_region
    _
  $region13: #{tpu_custom_call.1} parent=0 // pred_fallthru
    _
  // Predicated region
  $region14: #{tpu_custom_call.1} parent=0 // pred_check
    _
  $region15: #{tpu_custom_call.1} parent=0 // pred_check_branch
    %87 = sbr.rel (0) target = $region17
  $region16: #{tpu_custom_call.1} parent=0 // pred_region
    _
  $region17: #{tpu_custom_call.1} parent=0 // pred_fallthru
    _

</llo_original>
